<compile_context>
chip_gen: v7x
topology: tpu7x:2x2x1
jax: 0.10.0
libtpu: 0.0.40
codegen_flags: <defaults>
</compile_context>

<pallas_src>
import jax
import jax.numpy as jnp
from jax.experimental import pallas as pl
from jax.experimental.pallas import tpu as pltpu


def _round_up(x, m):
    return (x + m - 1) // m * m


def combine_kernel(x1_ref, x2_ref, w1_ref, b1_ref, w2_ref, b2_ref,
                   w3a_ref, w3b_ref, b3_ref, out_ref):
    # model1: Linear(D1 -> H) + ReLU  (MXU matmul, f32 accumulate, VPU epilogue)
    h1 = jnp.dot(x1_ref[...], w1_ref[...], preferred_element_type=jnp.float32)
    h1 = jnp.maximum(h1 + b1_ref[...], 0.0)
    # model2: Linear(D2 -> H) + ReLU
    h2 = jnp.dot(x2_ref[...], w2_ref[...], preferred_element_type=jnp.float32)
    h2 = jnp.maximum(h2 + b2_ref[...], 0.0)
    # model3: concat(h1, h2) @ W3 + b3  ==  h1 @ W3[:H] + h2 @ W3[H:] + b3
    pred = jnp.dot(h1.astype(w3a_ref.dtype), w3a_ref[...],
                   preferred_element_type=jnp.float32)
    pred = pred + jnp.dot(h2.astype(w3b_ref.dtype), w3b_ref[...],
                          preferred_element_type=jnp.float32)
    pred = pred + b3_ref[...]
    out_ref[...] = pred.astype(out_ref.dtype)


def combine_model_forward(x1, x2, params, *, tile_b=4096,
                          compute_dtype=jnp.bfloat16, out_dtype=None,
                          return_padded=False):
    """Fused forward pass of combine_model.

    Returns a (B, C) array in `out_dtype` (default: compute_dtype), or the
    lane-dense padded (B_pad, 128) slab if return_padded=True.
    """
    w1, b1, w2, b2, w3, b3 = params
    B, D1 = x1.shape
    Bx2, D2 = x2.shape
    assert Bx2 == B
    H = w1.shape[1]
    C = w3.shape[1]
    assert w3.shape[0] == 2 * H

    out_dtype = compute_dtype if out_dtype is None else out_dtype
    C_pad = _round_up(max(C, 1), 128)        # lane-dense output (unmasked vst)

    in_item = jnp.dtype(compute_dtype).itemsize
    out_item = jnp.dtype(out_dtype).itemsize
    # bf16 packs two rows per sublane -> (16, 128) minimal tile on sub-32-bit refs
    mult = 16 if min(in_item, out_item) < 4 else 8

    # ---- tile_b selection ------------------------------------------------
    # Cap so double-buffered activation + output blocks fit a conservative
    # VMEM budget that works on every generation (v7x has only 64 MiB / TC).
    vmem_budget = 24 * 1024 * 1024
    per_row = 2 * ((D1 + D2) * in_item + C_pad * out_item)
    cap = max((vmem_budget // per_row) // mult * mult, mult)

    B_aligned = _round_up(B, mult)
    tile_b = min(tile_b, cap, B_aligned)
    # v7x megacore: keep >= 4 grid steps (>= 2 per TensorCore) for large batches
    if B_aligned >= 4 * 1024:
        tile_b = min(tile_b, max(_round_up(B_aligned // 4, mult), 1024))
    tile_b = _round_up(max(tile_b, mult), mult)
    B_pad = _round_up(B, tile_b)

    # ---- operand prep (tiny host-side work; no lane padding of x) ---------
    def _prep_x(x):
        x = x.astype(compute_dtype)
        if B_pad != B:
            x = jnp.pad(x, ((0, B_pad - B), (0, 0)))
        return x

    x1p = _prep_x(x1)
    x2p = _prep_x(x2)

    w1c = w1.astype(compute_dtype)                       # (D1, H)
    w2c = w2.astype(compute_dtype)                       # (D2, H)
    b1f = b1.reshape(1, H).astype(jnp.float32)
    b2f = b2.reshape(1, H).astype(jnp.float32)
    # W3 split into its two concat halves, zero-padded on the lane axis only.
    w3a = jnp.zeros((H, C_pad), compute_dtype).at[:, :C].set(
        w3[:H].astype(compute_dtype))
    w3b = jnp.zeros((H, C_pad), compute_dtype).at[:, :C].set(
        w3[H:].astype(compute_dtype))
    b3p = jnp.zeros((1, C_pad), jnp.float32).at[:, :C].set(
        b3.reshape(1, C).astype(jnp.float32))

    # ---- pallas_call -------------------------------------------------------
    grid = (B_pad // tile_b,)
    flops = 2 * B_pad * H * (D1 + D2) + 2 * B_pad * (2 * H) * C_pad
    bytes_accessed = (B_pad * (D1 + D2) * in_item          # x1, x2
                      + (D1 + D2) * H * in_item            # W1, W2
                      + 2 * H * C_pad * in_item            # W3 halves
                      + 2 * H * 4 + C_pad * 4               # biases (f32)
                      + B_pad * C_pad * out_item)           # output slab

    out_padded = pl.pallas_call(
        combine_kernel,
        out_shape=jax.ShapeDtypeStruct((B_pad, C_pad), out_dtype),
        grid=grid,
        in_specs=[
            # batch-tiled activations; full-array last dim (D1 / D2) is legal
            pl.BlockSpec((tile_b, D1), lambda i: (i, 0)),
            pl.BlockSpec((tile_b, D2), lambda i: (i, 0)),
            # weights / biases: constant index_map -> loaded once, VMEM-resident
            pl.BlockSpec((D1, H), lambda i: (0, 0)),
            pl.BlockSpec((1, H), lambda i: (0, 0)),
            pl.BlockSpec((D2, H), lambda i: (0, 0)),
            pl.BlockSpec((1, H), lambda i: (0, 0)),
            pl.BlockSpec((H, C_pad), lambda i: (0, 0)),
            pl.BlockSpec((H, C_pad), lambda i: (0, 0)),
            pl.BlockSpec((1, C_pad), lambda i: (0, 0)),
        ],
        out_specs=pl.BlockSpec((tile_b, C_pad), lambda i: (i, 0)),
        compiler_params=pltpu.CompilerParams(
            dimension_semantics=("parallel",),
            vmem_limit_bytes=40 * 1024 * 1024),
        cost_estimate=pl.CostEstimate(flops=flops, transcendentals=0,
                                      bytes_accessed=bytes_accessed),
    )(x1p, x2p, w1c, b1f, w2c, b2f, w3a, w3b, b3p)

    if return_padded:
        # NOTE: rows >= B and lanes >= C contain padding garbage by design.
        return out_padded
    return out_padded[:B, :C]


def init_params(key, d1, d2, h, c):
    ks = jax.random.split(key, 6)
    scale = 0.1
    w1 = scale * jax.random.normal(ks[0], (d1, h), jnp.float32)
    b1 = scale * jax.random.normal(ks[1], (1, h), jnp.float32)
    w2 = scale * jax.random.normal(ks[2], (d2, h), jnp.float32)
    b2 = scale * jax.random.normal(ks[3], (1, h), jnp.float32)
    w3 = scale * jax.random.normal(ks[4], (2 * h, c), jnp.float32)
    b3 = scale * jax.random.normal(ks[5], (1, c), jnp.float32)
    return (w1, b1, w2, b2, w3, b3)


def reference_forward(x1, x2, params):
    (w1, b1, w2, b2, w3, b3) = params
    h1 = jnp.maximum(x1 @ w1 + b1, 0.0)
    h2 = jnp.maximum(x2 @ w2 + b2, 0.0)
    return jnp.concatenate([h1, h2], axis=-1) @ w3 + b3


if __name__ == "__main__":
    B, D1, D2, H, C = 8, 16, 24, 32, 8
    key = jax.random.PRNGKey(0)
    k1, k2, k3, k4, kp = jax.random.split(key, 5)

    params = init_params(kp, D1, D2, H, C)

    # --- f32 path (tight check, all chips) -------------------------------
    x1 = jax.random.normal(k1, (B, D1), jnp.float32)
    x2 = jax.random.normal(k2, (B, D2), jnp.float32)
    out = combine_model_forward(x1, x2, params, compute_dtype=jnp.float32)
    out = jax.block_until_ready(out)
    ref = reference_forward(x1, x2, params)
    assert out.shape == (B, C)
    assert jnp.allclose(out, ref, atol=1e-5, rtol=1e-5)

    # --- default bf16 path (MXU-native), ragged batch exercises padding --
    B2 = 13
    x1b = jax.random.normal(k3, (B2, D1), jnp.float32)
    x2b = jax.random.normal(k4, (B2, D2), jnp.float32)
    out_bf16 = combine_model_forward(x1b, x2b, params)   # bf16 compute/output
    out_bf16 = jax.block_until_ready(out_bf16)
    ref_b = reference_forward(x1b, x2b, params)
    assert out_bf16.shape == (B2, C)
    assert jnp.allclose(out_bf16.astype(jnp.float32), ref_b,
                        atol=5e-2, rtol=5e-2)

    print("KERNEL_OK")
</pallas_src>

<mosaic_0001>
module attributes {stable_mosaic.version = 11 : i64} {
  func.func @combine_kernel(%arg0: i32, %arg1: memref<8x16xf32, #tpu.memory_space<vmem>>, %arg2: memref<8x24xf32, #tpu.memory_space<vmem>>, %arg3: memref<16x32xf32, #tpu.memory_space<vmem>>, %arg4: memref<1x32xf32, #tpu.memory_space<vmem>>, %arg5: memref<24x32xf32, #tpu.memory_space<vmem>>, %arg6: memref<1x32xf32, #tpu.memory_space<vmem>>, %arg7: memref<32x128xf32, #tpu.memory_space<vmem>>, %arg8: memref<32x128xf32, #tpu.memory_space<vmem>>, %arg9: memref<1x128xf32, #tpu.memory_space<vmem>>, %arg10: memref<8x128xf32, #tpu.memory_space<vmem>>) attributes {dimension_semantics = [#tpu.dimension_semantics<parallel>], iteration_bounds = array<i64: 1>, scalar_prefetch = 0 : i64, scratch_operands = 0 : i64, tpu.core_type = #tpu.core_type<tc>, window_params = [{transform_indices = @transform_0, window_bounds = array<i64: 8, 16>}, {transform_indices = @transform_1, window_bounds = array<i64: 8, 24>}, {pipeline_mode = #tpu.pipeline_mode<synchronous>, transform_indices = @transform_2, window_bounds = array<i64: 16, 32>}, {pipeline_mode = #tpu.pipeline_mode<synchronous>, transform_indices = @transform_3, window_bounds = array<i64: 1, 32>}, {pipeline_mode = #tpu.pipeline_mode<synchronous>, transform_indices = @transform_4, window_bounds = array<i64: 24, 32>}, {pipeline_mode = #tpu.pipeline_mode<synchronous>, transform_indices = @transform_5, window_bounds = array<i64: 1, 32>}, {pipeline_mode = #tpu.pipeline_mode<synchronous>, transform_indices = @transform_6, window_bounds = array<i64: 32, 128>}, {pipeline_mode = #tpu.pipeline_mode<synchronous>, transform_indices = @transform_7, window_bounds = array<i64: 32, 128>}, {pipeline_mode = #tpu.pipeline_mode<synchronous>, transform_indices = @transform_8, window_bounds = array<i64: 1, 128>}, {transform_indices = @transform_9, window_bounds = array<i64: 8, 128>}]} {
    %c0 = arith.constant 0 : index
    %c0_0 = arith.constant 0 : index
    %0 = vector.load %arg1[%c0, %c0_0] : memref<8x16xf32, #tpu.memory_space<vmem>>, vector<8x16xf32>
    %c0_1 = arith.constant 0 : index
    %c0_2 = arith.constant 0 : index
    %1 = vector.load %arg3[%c0_1, %c0_2] : memref<16x32xf32, #tpu.memory_space<vmem>>, vector<16x32xf32>
    %cst = arith.constant dense<0.000000e+00> : vector<8x32xf32>
    %2 = tpu.matmul %0, %1, %cst {dimension_numbers = #tpu.dot_dimension_numbers<[1], [0], [0], [1], [0, 0, 1, 1], [], []>} : vector<8x16xf32>, vector<16x32xf32>, vector<8x32xf32> -> vector<8x32xf32>
    %c0_3 = arith.constant 0 : index
    %c0_4 = arith.constant 0 : index
    %3 = vector.load %arg4[%c0_3, %c0_4] : memref<1x32xf32, #tpu.memory_space<vmem>>, vector<1x32xf32>
    %4 = vector.broadcast %3 : vector<1x32xf32> to vector<8x32xf32>
    %5 = arith.addf %2, %4 : vector<8x32xf32>
    %cst_5 = arith.constant 0.000000e+00 : f32
    %6 = vector.broadcast %cst_5 : f32 to vector<8x32xf32>
    %7 = arith.maximumf %5, %6 : vector<8x32xf32>
    %c0_6 = arith.constant 0 : index
    %c0_7 = arith.constant 0 : index
    %8 = vector.load %arg2[%c0_6, %c0_7] : memref<8x24xf32, #tpu.memory_space<vmem>>, vector<8x24xf32>
    %c0_8 = arith.constant 0 : index
    %c0_9 = arith.constant 0 : index
    %9 = vector.load %arg5[%c0_8, %c0_9] : memref<24x32xf32, #tpu.memory_space<vmem>>, vector<24x32xf32>
    %cst_10 = arith.constant dense<0.000000e+00> : vector<8x32xf32>
    %10 = tpu.matmul %8, %9, %cst_10 {dimension_numbers = #tpu.dot_dimension_numbers<[1], [0], [0], [1], [0, 0, 1, 1], [], []>} : vector<8x24xf32>, vector<24x32xf32>, vector<8x32xf32> -> vector<8x32xf32>
    %c0_11 = arith.constant 0 : index
    %c0_12 = arith.constant 0 : index
    %11 = vector.load %arg6[%c0_11, %c0_12] : memref<1x32xf32, #tpu.memory_space<vmem>>, vector<1x32xf32>
    %12 = vector.broadcast %11 : vector<1x32xf32> to vector<8x32xf32>
    %13 = arith.addf %10, %12 : vector<8x32xf32>
    %cst_13 = arith.constant 0.000000e+00 : f32
    %14 = vector.broadcast %cst_13 : f32 to vector<8x32xf32>
    %15 = arith.maximumf %13, %14 : vector<8x32xf32>
    %c0_14 = arith.constant 0 : index
    %c0_15 = arith.constant 0 : index
    %16 = vector.load %arg7[%c0_14, %c0_15] : memref<32x128xf32, #tpu.memory_space<vmem>>, vector<32x128xf32>
    %cst_16 = arith.constant dense<0.000000e+00> : vector<8x128xf32>
    %17 = tpu.matmul %7, %16, %cst_16 {dimension_numbers = #tpu.dot_dimension_numbers<[1], [0], [0], [1], [0, 0, 1, 1], [], []>} : vector<8x32xf32>, vector<32x128xf32>, vector<8x128xf32> -> vector<8x128xf32>
    %c0_17 = arith.constant 0 : index
    %c0_18 = arith.constant 0 : index
    %18 = vector.load %arg8[%c0_17, %c0_18] : memref<32x128xf32, #tpu.memory_space<vmem>>, vector<32x128xf32>
    %cst_19 = arith.constant dense<0.000000e+00> : vector<8x128xf32>
    %19 = tpu.matmul %15, %18, %cst_19 {dimension_numbers = #tpu.dot_dimension_numbers<[1], [0], [0], [1], [0, 0, 1, 1], [], []>} : vector<8x32xf32>, vector<32x128xf32>, vector<8x128xf32> -> vector<8x128xf32>
    %20 = arith.addf %17, %19 : vector<8x128xf32>
    %c0_20 = arith.constant 0 : index
    %c0_21 = arith.constant 0 : index
    %21 = vector.load %arg9[%c0_20, %c0_21] : memref<1x128xf32, #tpu.memory_space<vmem>>, vector<1x128xf32>
    %22 = vector.broadcast %21 : vector<1x128xf32> to vector<8x128xf32>
    %23 = arith.addf %20, %22 : vector<8x128xf32>
    %c0_22 = arith.constant 0 : index
    %c0_23 = arith.constant 0 : index
    %24 = vector.load %arg10[%c0_22, %c0_23] : memref<8x128xf32, #tpu.memory_space<vmem>>, vector<8x128xf32>
    tpu.vector_store %arg10[%c0_22, %c0_23], %23 {strides = array<i32>} : memref<8x128xf32, #tpu.memory_space<vmem>>, vector<8x128xf32>,
    return
  }
  func.func @transform_0(%arg0: i32) -> (i32, i32) {
    %c0_i32 = arith.constant 0 : i32
    %c0_i32_0 = arith.constant 0 : i32
    return %arg0, %c0_i32 : i32, i32
  }
  func.func @transform_1(%arg0: i32) -> (i32, i32) {
    %c0_i32 = arith.constant 0 : i32
    %c0_i32_0 = arith.constant 0 : i32
    return %arg0, %c0_i32 : i32, i32
  }
  func.func @transform_2(%arg0: i32) -> (i32, i32) {
    %c0_i32 = arith.constant 0 : i32
    %c0_i32_0 = arith.constant 0 : i32
    %c0_i32_1 = arith.constant 0 : i32
    return %c0_i32, %c0_i32_0 : i32, i32
  }
  func.func @transform_3(%arg0: i32) -> (i32, i32) {
    %c0_i32 = arith.constant 0 : i32
    %c0_i32_0 = arith.constant 0 : i32
    %c0_i32_1 = arith.constant 0 : i32
    return %c0_i32, %c0_i32_0 : i32, i32
  }
  func.func @transform_4(%arg0: i32) -> (i32, i32) {
    %c0_i32 = arith.constant 0 : i32
    %c0_i32_0 = arith.constant 0 : i32
    %c0_i32_1 = arith.constant 0 : i32
    return %c0_i32, %c0_i32_0 : i32, i32
  }
  func.func @transform_5(%arg0: i32) -> (i32, i32) {
    %c0_i32 = arith.constant 0 : i32
    %c0_i32_0 = arith.constant 0 : i32
    %c0_i32_1 = arith.constant 0 : i32
    return %c0_i32, %c0_i32_0 : i32, i32
  }
  func.func @transform_6(%arg0: i32) -> (i32, i32) {
    %c0_i32 = arith.constant 0 : i32
    %c0_i32_0 = arith.constant 0 : i32
    %c0_i32_1 = arith.constant 0 : i32
    return %c0_i32, %c0_i32_0 : i32, i32
  }
  func.func @transform_7(%arg0: i32) -> (i32, i32) {
    %c0_i32 = arith.constant 0 : i32
    %c0_i32_0 = arith.constant 0 : i32
    %c0_i32_1 = arith.constant 0 : i32
    return %c0_i32, %c0_i32_0 : i32, i32
  }
  func.func @transform_8(%arg0: i32) -> (i32, i32) {
    %c0_i32 = arith.constant 0 : i32
    %c0_i32_0 = arith.constant 0 : i32
    %c0_i32_1 = arith.constant 0 : i32
    return %c0_i32, %c0_i32_0 : i32, i32
  }
  func.func @transform_9(%arg0: i32) -> (i32, i32) {
    %c0_i32 = arith.constant 0 : i32
    %c0_i32_0 = arith.constant 0 : i32
    return %arg0, %c0_i32 : i32, i32
  }
}

</mosaic_0001>

<llo_original>
// kernel: tpu_custom_call.1
$region0: #{tpu_custom_call.1}
  #allocation0 [shape = 'u32[]', space=smem, size = 0x4, offset = 0x4, fixed_abs, tag = 'smem constant byte address 0x4 - core index']
  #allocation1 [shape = 'u32[144,128]{1,0:T(1,128)}', space=vmem, size = 0x12000, scoped, tag = 'internal scratch']
  %s0 = inlined_call_operand.hbm [shape: f32[8,16], index: 0, kind: input, shape index: {}]
  %s1 = inlined_call_operand.hbm [shape: f32[8,24], index: 1, kind: input, shape index: {}]
  %s2 = inlined_call_operand.hbm [shape: f32[16,32], index: 2, kind: input, shape index: {}]
  %s3 = inlined_call_operand.vmem [shape: f32[1,32], index: 3, kind: input, shape index: {}]
  %s4 = inlined_call_operand.hbm [shape: f32[24,32], index: 4, kind: input, shape index: {}]
  %s5 = inlined_call_operand.vmem [shape: f32[1,32], index: 5, kind: input, shape index: {}]
  %s6 = inlined_call_operand.hbm [shape: f32[32,128], index: 6, kind: input, shape index: {}]
  %s7 = inlined_call_operand.hbm [shape: f32[32,128], index: 7, kind: input, shape index: {}]
  %s8 = inlined_call_operand.vmem [shape: f32[1,128], index: 8, kind: input, shape index: {}]
  %s9 = inlined_call_operand.hbm [shape: f32[8,128], index: 9, kind: output, shape index: {}]
  %s10 = sld [smem:[#allocation0]]
  $region70: #{tpu_custom_call.1} parent=0
    _
  %s12 = ssub.s32 1, %s10
  %s13 = scalar_select 0, %s12, %s10
  $region1: #{tpu_custom_call.1} parent=0
    #allocation2 [shape = 'u8[4096]{0}', space=vmem, size = 0x1000, scoped, tag = 'input window, operand 0, single buffered']
    #allocation3 [shape = 's32[1]{0}', space=sflag, size = 0x4, scoped, tag = 'scoped memory for tpu_custom_call.1']
    #allocation4 [shape = 's32[1]{0}', space=sflag, size = 0x4, scoped, tag = 'scoped memory for tpu_custom_call.1']
    #allocation5 [shape = 'u8[4096]{0}', space=vmem, size = 0x1000, scoped, tag = 'input window, operand 1, single buffered']
    #allocation6 [shape = 's32[1]{0}', space=sflag, size = 0x4, scoped, tag = 'scoped memory for tpu_custom_call.1']
    #allocation7 [shape = 'u8[8192]{0}', space=vmem, size = 0x2000, scoped, tag = 'input window, operand 2, single buffered']
    #allocation8 [shape = 'u8[12288]{0}', space=vmem, size = 0x3000, scoped, tag = 'input window, operand 4, single buffered']
    #allocation9 [shape = 's32[1]{0}', space=sflag, size = 0x4, scoped, tag = 'scoped memory for tpu_custom_call.1']
    #allocation10 [shape = 'u8[16384]{0}', space=vmem, size = 0x4000, scoped, tag = 'input window, operand 6, single buffered']
    #allocation11 [shape = 'u8[16384]{0}', space=vmem, size = 0x4000, scoped, tag = 'input window, operand 7, single buffered']
    #allocation12 [shape = 's32[1]{0}', space=sflag, size = 0x4, scoped, tag = 'scoped memory for tpu_custom_call.1']
    #allocation13 [shape = 'u8[4096]{0}', space=vmem, size = 0x1000, scoped, tag = 'output window, operand 0, single buffered']
    %14 = vsyncpa [#allocation3], 0
    %15 = vsyncpa [#allocation6], 0
    %16 = vsyncpa [#allocation9], 0
    %17 = vsyncpa [#allocation12], 0
    %18 = vsyncpa [#allocation4], 0
    // Predicated region
    $region2: #{tpu_custom_call.1} parent=1 // pred_check
      _
    $region3: #{tpu_custom_call.1} parent=1 // pred_check_branch
      %20 = sbr.rel (0) target = $region5
    $region4: #{tpu_custom_call.1} parent=1 // pred_region
      %s22 = ssub.s32 128, 128
      %23 = vsyncadd [#allocation3], %s22
      %s25 = sshll.u32 [#allocation2], 4
      %s26 = int_to_ptr.vmem [resolvable:$true] %s25
      %28 = dma.hbm_to_vmem [thread:$0]  %s0, 128, %s26, [#allocation3]
    $region5: #{tpu_custom_call.1} parent=1 // pred_fallthru
      _
    // Predicated region
    $region6: #{tpu_custom_call.1} parent=1 // pred_check
      _
    $region7: #{tpu_custom_call.1} parent=1 // pred_check_branch
      %30 = sbr.rel (0) target = $region9
    $region8: #{tpu_custom_call.1} parent=1 // pred_region
      %s32 = ssub.s32 128, 128
      %33 = vsyncadd [#allocation6], %s32
      %s35 = sshll.u32 [#allocation5], 4
      %s36 = int_to_ptr.vmem [resolvable:$true] %s35
      %38 = dma.hbm_to_vmem [thread:$0]  %s1, 128, %s36, [#allocation6]
    $region9: #{tpu_custom_call.1} parent=1 // pred_fallthru
      _
    // Predicated region
    $region10: #{tpu_custom_call.1} parent=1 // pred_check
      _
    $region11: #{tpu_custom_call.1} parent=1 // pred_check_branch
      %40 = sbr.rel (0) target = $region13
    $region12: #{tpu_custom_call.1} parent=1 // pred_region
      %s42 = ssub.s32 256, 256
      %43 = vsyncadd [#allocation6], %s42
      %s44 = sshll.u32 [#allocation7], 4
      %s45 = int_to_ptr.vmem [resolvable:$true] %s44
      %50 = dma.hbm_to_vmem [thread:$0]  %s2, 256, %s45, [#allocation6], 128, 128, 8
    $region13: #{tpu_custom_call.1} parent=1 // pred_fallthru
      _
    // Predicated region
    $region14: #{tpu_custom_call.1} parent=1 // pred_check
      _
    $region15: #{tpu_custom_call.1} parent=1 // pred_check_branch
      %52 = sbr.rel (0) target = $region17
    $region16: #{tpu_custom_call.1} parent=1 // pred_region
      _
    $region17: #{tpu_custom_call.1} parent=1 // pred_fallthru
      _
    // Predicated region
    $region18: #{tpu_custom_call.1} parent=1 // pred_check
      _
    $region19: #{tpu_custom_call.1} parent=1 // pred_check_branch
      %54 = sbr.rel (0) target = $region21
    $region20: #{tpu_custom_call.1} parent=1 // pred_region
      %s56 = ssub.s32 384, 384
      %57 = vsyncadd [#allocation9], %s56
      %s58 = sshll.u32 [#allocation8], 4
      %s59 = int_to_ptr.vmem [resolvable:$true] %s58
      %64 = dma.hbm_to_vmem [thread:$0]  %s4, 384, %s59, [#allocation9], 128, 128, 8
    $region21: #{tpu_custom_call.1} parent=1 // pred_fallthru
      _
    // Predicated region
    $region22: #{tpu_custom_call.1} parent=1 // pred_check
      _
    $region23: #{tpu_custom_call.1} parent=1 // pred_check_branch
      %66 = sbr.rel (0) target = $region25
    $region24: #{tpu_custom_call.1} parent=1 // pred_region
      _
    $region25: #{tpu_custom_call.1} parent=1 // pred_fallthru
      _
    // Predicated region
    $region26: #{tpu_custom_call.1} parent=1 // pred_check
      _
    $region27: #{tpu_custom_call.1} parent=1 // pred_check_branch
      %68 = sbr.rel (0) target = $region29
    $region28: #{tpu_custom_call.1} parent=1 // pred_region
      %s70 = ssub.s32 512, 512
      %71 = vsyncadd [#allocation9], %s70
      %s72 = sshll.u32 [#allocation10], 4
      %s73 = int_to_ptr.vmem [resolvable:$true] %s72
      %78 = dma.hbm_to_vmem [thread:$0]  %s6, 512, %s73, [#allocation9], 128, 128, 8
    $region29: #{tpu_custom_call.1} parent=1 // pred_fallthru
      _
    // Predicated region
    $region30: #{tpu_custom_call.1} parent=1 // pred_check
      _
    $region31: #{tpu_custom_call.1} parent=1 // pred_check_branch
      %80 = sbr.rel (0) target = $region33
    $region32: #{tpu_custom_call.1} parent=1 // pred_region
      %s82 = ssub.s32 512, 512
      %83 = vsyncadd [#allocation12], %s82
      %s84 = sshll.u32 [#allocation11], 4
      %s85 = int_to_ptr.vmem [resolvable:$true] %s84
      %90 = dma.hbm_to_vmem [thread:$0]  %s7, 512, %s85, [#allocation12], 128, 128, 8
    $region33: #{tpu_custom_call.1} parent=1 // pred_fallthru
      _
    // Predicated region
    $region34: #{tpu_custom_call.1} parent=1 // pred_check
      _
    $region35: #{tpu_custom_call.1} parent=1 // pred_check_branch
      %92 = sbr.rel (0) target = $region37
    $region36: #{tpu_custom_call.1} parent=1 // pred_region
      _
    $region37: #{tpu_custom_call.1} parent=1 // pred_fallthru
      _
    // Predicated region
    $region38: #{tpu_custom_call.1} parent=1 // pred_check
      _
    $region39: #{tpu_custom_call.1} parent=1 // pred_check_branch
      %94 = sbr.rel (0) target = $region41
    $region40: #{tpu_custom_call.1} parent=1 // pred_region
      %95 = dma.done [#allocation3], 128
    $region41: #{tpu_custom_call.1} parent=1 // pred_fallthru
      _
    // Predicated region
    $region42: #{tpu_custom_call.1} parent=1 // pred_check
      _
    $region43: #{tpu_custom_call.1} parent=1 // pred_check_branch
      %97 = sbr.rel (0) target = $region45
    $region44: #{tpu_custom_call.1} parent=1 // pred_region
      %98 = dma.done [#allocation6], 128
    $region45: #{tpu_custom_call.1} parent=1 // pred_fallthru
      _
    // Predicated region
    $region46: #{tpu_custom_call.1} parent=1 // pred_check
      _
    $region47: #{tpu_custom_call.1} parent=1 // pred_check_branch
      %100 = sbr.rel (0) target = $region49
    $region48: #{tpu_custom_call.1} parent=1 // pred_region
      %101 = dma.done [#allocation6], 256
    $region49: #{tpu_custom_call.1} parent=1 // pred_fallthru
      _
    // Predicated region
    $region50: #{tpu_custom_call.1} parent=1 // pred_check
      _
    $region51: #{tpu_custom_call.1} parent=1 // pred_check_branch
      %103 = sbr.rel (0) target = $region53
    $region52: #{tpu_custom_call.1} parent=1 // pred_region
      %104 = dma.done [#allocation9], 384
    $region53: #{tpu_custom_call.1} parent=1 // pred_fallthru
      _
    // Predicated region
    $region54: #{tpu_custom_call.1} parent=1 // pred_check
      _
    $region55: #{tpu_custom_call.1} parent=1 // pred_check_branch
      %106 = sbr.rel (0) target = $region57
    $region56: #{tpu_custom_call.1} parent=1 // pred_region
      %107 = dma.done [#allocation9], 512
    $region57: #{tpu_custom_call.1} parent=1 // pred_fallthru
      _
    // Predicated region
    $region58: #{tpu_custom_call.1} parent=1 // pred_check
      _
    $region59: #{tpu_custom_call.1} parent=1 // pred_check_branch
      %109 = sbr.rel (0) target = $region61
    $region60: #{tpu_custom_call.1} parent=1 // pred_region
      %110 = dma.done [#allocation12], 512
    $region61: #{tpu_custom_call.1} parent=1 // pred_fallthru
      _
    %v111 = vld [vmem:[#allocation2] sm:$0xff]
    %v112 = vld [vmem:[#allocation7] sm:$0xff]
    %v113 = vld [vmem:[#allocation7 + $0x8] sm:$0xff]
    %v114 = vld [vmem:[%s3] sm:$0x1]
    %v116 = vlaneseq
    %v117 = vshrl.u32 %v116, 7
    %v118 = vsub.s32 0, %v117
    %v119 = vrot.slane %v114, %v118
    %vm121 = vcmask 130048
    %v123 = vsel %vm121, %v111, 0
    %125 = vmatprep.subr.mxu0 0.0
    %126 = vmatpush1.msra.mxu0 %v112
    %127 = vmatprep.subr.mxu0 0.0
    %128 = vmatpush1.msra.mxu0 %v113
    %129 = vmatprep.subr.mxu0 0.0
    %130 = vmatpush1.msra.mxu0 0.0
    %131 = vmatprep.subr.mxu0 0.0
    %132 = vmatpush1.msra.mxu0 0.0
    %133 = vmatprep.subr.mxu0 0.0
    %134 = vmatpush1.msra.mxu0 0.0
    %135 = vmatprep.subr.mxu0 0.0
    %136 = vmatpush1.msra.mxu0 0.0
    %137 = vmatprep.subr.mxu0 0.0
    %138 = vmatpush1.msra.mxu0 0.0
    %139 = vmatprep.subr.mxu0 0.0
    %140 = vmatpush1.msra.mxu0 0.0
    %141 = vmatprep.subr.mxu0 0.0
    %142 = vmatpush1.msra.mxu0 0.0
    %143 = vmatprep.subr.mxu0 0.0
    %144 = vmatpush1.msra.mxu0 0.0
    %145 = vmatprep.subr.mxu0 0.0
    %146 = vmatpush1.msra.mxu0 0.0
    %147 = vmatprep.subr.mxu0 0.0
    %148 = vmatpush1.msra.mxu0 0.0
    %149 = vmatprep.subr.mxu0 0.0
    %150 = vmatpush1.msra.mxu0 0.0
    %151 = vmatprep.subr.mxu0 0.0
    %152 = vmatpush1.msra.mxu0 0.0
    %153 = vmatprep.subr.mxu0 0.0
    %154 = vmatpush1.msra.mxu0 0.0
    %155 = vmatprep.subr.mxu0 0.0
    %156 = vmatpush1.msra.mxu0 0.0
    %157 = vmatprep.subr.mxu0 0.0
    %158 = vmatpush1.msra.mxu0 0.0
    %159 = vmatprep.subr.mxu0 0.0
    %160 = vmatpush1.msra.mxu0 0.0
    %161 = vmatprep.subr.mxu0 0.0
    %162 = vmatpush1.msra.mxu0 0.0
    %163 = vmatprep.subr.mxu0 0.0
    %164 = vmatpush1.msra.mxu0 0.0
    %165 = vmatprep.subr.mxu0 0.0
    %166 = vmatpush1.msra.mxu0 0.0
    %167 = vmatprep.subr.mxu0 0.0
    %168 = vmatpush1.msra.mxu0 0.0
    %169 = vmatprep.subr.mxu0 0.0
    %170 = vmatpush1.msra.mxu0 0.0
    %171 = vmatprep.subr.mxu0 0.0
    %172 = vmatpush1.msra.mxu0 0.0
    %173 = vmatprep.subr.mxu0 0.0
    %174 = vmatpush1.msra.mxu0 0.0
    %175 = vmatprep.subr.mxu0 0.0
    %176 = vmatpush1.msra.mxu0 0.0
    %177 = vmatprep.subr.mxu0 0.0
    %178 = vmatpush1.msra.mxu0 0.0
    %179 = vmatprep.subr.mxu0 0.0
    %180 = vmatpush1.msra.mxu0 0.0
    %181 = vmatprep.subr.mxu0 0.0
    %182 = vmatpush1.msra.mxu0 0.0
    %183 = vmatprep.subr.mxu0 0.0
    %184 = vmatpush1.msra.mxu0 0.0
    %185 = vmatprep.subr.mxu0 0.0
    %186 = vmatpush1.msra.mxu0 0.0
    %187 = vmatprep.subr.mxu0 0.0
    %188 = vmatpush1.msra.mxu0 0.0
    %189 = vmatprep.mubr.f32.mxu0 0.0
    %190 = vmatmul.mubr.f32.gmra.mrb[0].mxu0 %v123
    %v191 = vpop.f32.mrb[0].mxu0
    %v192 = vadd.f32 %v119, %v191
    %v193 = vpop.f32.mrb[0].mxu0
    %194 = vdwg.mxu0
    %v195 = vmax.f32 %v192, 0.0
    %v196 = vld [vmem:[#allocation5] sm:$0xff]
    %v197 = vld [vmem:[#allocation8] sm:$0xff]
    %v198 = vld [vmem:[#allocation8 + $0x8] sm:$0xff]
    %v199 = vld [vmem:[#allocation8 + $0x10] sm:$0xff]
    %v200 = vld [vmem:[%s5] sm:$0x1]
    %v202 = vlaneseq
    %v203 = vshrl.u32 %v202, 7
    %v204 = vsub.s32 0, %v203
    %v205 = vrot.slane %v200, %v204
    %vm207 = vcmask 195584
    %v209 = vsel %vm207, %v196, 0
    %211 = vmatprep.subr.mxu0 0.0
    %212 = vmatpush1.msra.mxu0 %v197
    %213 = vmatprep.subr.mxu0 0.0
    %214 = vmatpush1.msra.mxu0 %v198
    %215 = vmatprep.subr.mxu0 0.0
    %216 = vmatpush1.msra.mxu0 %v199
    %217 = vmatprep.subr.mxu0 0.0
    %218 = vmatpush1.msra.mxu0 0.0
    %219 = vmatprep.subr.mxu0 0.0
    %220 = vmatpush1.msra.mxu0 0.0
    %221 = vmatprep.subr.mxu0 0.0
    %222 = vmatpush1.msra.mxu0 0.0
    %223 = vmatprep.subr.mxu0 0.0
    %224 = vmatpush1.msra.mxu0 0.0
    %225 = vmatprep.subr.mxu0 0.0
    %226 = vmatpush1.msra.mxu0 0.0
    %227 = vmatprep.subr.mxu0 0.0
    %228 = vmatpush1.msra.mxu0 0.0
    %229 = vmatprep.subr.mxu0 0.0
    %230 = vmatpush1.msra.mxu0 0.0
    %231 = vmatprep.subr.mxu0 0.0
    %232 = vmatpush1.msra.mxu0 0.0
    %233 = vmatprep.subr.mxu0 0.0
    %234 = vmatpush1.msra.mxu0 0.0
    %235 = vmatprep.subr.mxu0 0.0
    %236 = vmatpush1.msra.mxu0 0.0
    %237 = vmatprep.subr.mxu0 0.0
    %238 = vmatpush1.msra.mxu0 0.0
    %239 = vmatprep.subr.mxu0 0.0
    %240 = vmatpush1.msra.mxu0 0.0
    %241 = vmatprep.subr.mxu0 0.0
    %242 = vmatpush1.msra.mxu0 0.0
    %243 = vmatprep.subr.mxu0 0.0
    %244 = vmatpush1.msra.mxu0 0.0
    %245 = vmatprep.subr.mxu0 0.0
    %246 = vmatpush1.msra.mxu0 0.0
    %247 = vmatprep.subr.mxu0 0.0
    %248 = vmatpush1.msra.mxu0 0.0
    %249 = vmatprep.subr.mxu0 0.0
    %250 = vmatpush1.msra.mxu0 0.0
    %251 = vmatprep.subr.mxu0 0.0
    %252 = vmatpush1.msra.mxu0 0.0
    %253 = vmatprep.subr.mxu0 0.0
    %254 = vmatpush1.msra.mxu0 0.0
    %255 = vmatprep.subr.mxu0 0.0
    %256 = vmatpush1.msra.mxu0 0.0
    %257 = vmatprep.subr.mxu0 0.0
    %258 = vmatpush1.msra.mxu0 0.0
    %259 = vmatprep.subr.mxu0 0.0
    %260 = vmatpush1.msra.mxu0 0.0
    %261 = vmatprep.subr.mxu0 0.0
    %262 = vmatpush1.msra.mxu0 0.0
    %263 = vmatprep.subr.mxu0 0.0
    %264 = vmatpush1.msra.mxu0 0.0
    %265 = vmatprep.subr.mxu0 0.0
    %266 = vmatpush1.msra.mxu0 0.0
    %267 = vmatprep.subr.mxu0 0.0
    %268 = vmatpush1.msra.mxu0 0.0
    %269 = vmatprep.subr.mxu0 0.0
    %270 = vmatpush1.msra.mxu0 0.0
    %271 = vmatprep.subr.mxu0 0.0
    %272 = vmatpush1.msra.mxu0 0.0
    %273 = vmatprep.subr.mxu0 0.0
    %274 = vmatpush1.msra.mxu0 0.0
    %275 = vmatprep.mubr.f32.mxu0 0.0
    %276 = vmatmul.mubr.f32.gmra.mrb[0].mxu0 %v209
    %v277 = vpop.f32.mrb[0].mxu0
    %v278 = vadd.f32 %v205, %v277
    %v279 = vpop.f32.mrb[0].mxu0
    %280 = vdwg.mxu0
    %v281 = vmax.f32 %v278, 0.0
    %v282 = vld [vmem:[#allocation10] sm:$0xff]
    %v283 = vld [vmem:[#allocation10 + $0x8] sm:$0xff]
    %v284 = vld [vmem:[#allocation10 + $0x10] sm:$0xff]
    %v285 = vld [vmem:[#allocation10 + $0x18] sm:$0xff]
    %v286 = vld [vmem:[#allocation11] sm:$0xff]
    %v287 = vld [vmem:[#allocation11 + $0x8] sm:$0xff]
    %v288 = vld [vmem:[#allocation11 + $0x10] sm:$0xff]
    %v289 = vld [vmem:[#allocation11 + $0x18] sm:$0xff]
    %vm290 = vcmask 261120
    %v292 = vsel %vm290, %v281, 0
    %294 = vmatprep.subr.mxu0 0.0
    %295 = vmatpush1.msra.mxu0 %v286
    %296 = vmatprep.subr.mxu0 0.0
    %297 = vmatpush1.msra.mxu0 %v287
    %298 = vmatprep.subr.mxu0 0.0
    %299 = vmatpush1.msra.mxu0 %v288
    %300 = vmatprep.subr.mxu0 0.0
    %301 = vmatpush1.msra.mxu0 %v289
    %302 = vmatprep.subr.mxu0 0.0
    %303 = vmatpush1.msra.mxu0 0.0
    %304 = vmatprep.subr.mxu0 0.0
    %305 = vmatpush1.msra.mxu0 0.0
    %306 = vmatprep.subr.mxu0 0.0
    %307 = vmatpush1.msra.mxu0 0.0
    %308 = vmatprep.subr.mxu0 0.0
    %309 = vmatpush1.msra.mxu0 0.0
    %310 = vmatprep.subr.mxu0 0.0
    %311 = vmatpush1.msra.mxu0 0.0
    %312 = vmatprep.subr.mxu0 0.0
    %313 = vmatpush1.msra.mxu0 0.0
    %314 = vmatprep.subr.mxu0 0.0
    %315 = vmatpush1.msra.mxu0 0.0
    %316 = vmatprep.subr.mxu0 0.0
    %317 = vmatpush1.msra.mxu0 0.0
    %318 = vmatprep.subr.mxu0 0.0
    %319 = vmatpush1.msra.mxu0 0.0
    %320 = vmatprep.subr.mxu0 0.0
    %321 = vmatpush1.msra.mxu0 0.0
    %322 = vmatprep.subr.mxu0 0.0
    %323 = vmatpush1.msra.mxu0 0.0
    %324 = vmatprep.subr.mxu0 0.0
    %325 = vmatpush1.msra.mxu0 0.0
    %326 = vmatprep.subr.mxu0 0.0
    %327 = vmatpush1.msra.mxu0 0.0
    %328 = vmatprep.subr.mxu0 0.0
    %329 = vmatpush1.msra.mxu0 0.0
    %330 = vmatprep.subr.mxu0 0.0
    %331 = vmatpush1.msra.mxu0 0.0
    %332 = vmatprep.subr.mxu0 0.0
    %333 = vmatpush1.msra.mxu0 0.0
    %334 = vmatprep.subr.mxu0 0.0
    %335 = vmatpush1.msra.mxu0 0.0
    %336 = vmatprep.subr.mxu0 0.0
    %337 = vmatpush1.msra.mxu0 0.0
    %338 = vmatprep.subr.mxu0 0.0
    %339 = vmatpush1.msra.mxu0 0.0
    %340 = vmatprep.subr.mxu0 0.0
    %341 = vmatpush1.msra.mxu0 0.0
    %342 = vmatprep.subr.mxu0 0.0
    %343 = vmatpush1.msra.mxu0 0.0
    %344 = vmatprep.subr.mxu0 0.0
    %345 = vmatpush1.msra.mxu0 0.0
    %346 = vmatprep.subr.mxu0 0.0
    %347 = vmatpush1.msra.mxu0 0.0
    %348 = vmatprep.subr.mxu0 0.0
    %349 = vmatpush1.msra.mxu0 0.0
    %350 = vmatprep.subr.mxu0 0.0
    %351 = vmatpush1.msra.mxu0 0.0
    %352 = vmatprep.subr.mxu0 0.0
    %353 = vmatpush1.msra.mxu0 0.0
    %354 = vmatprep.subr.mxu0 0.0
    %355 = vmatpush1.msra.mxu0 0.0
    %356 = vmatprep.subr.mxu0 0.0
    %357 = vmatpush1.msra.mxu0 0.0
    %358 = vmatprep.mubr.f32.mxu0 0.0
    %359 = vmatmul.mubr.f32.gmra.mrb[0].mxu0 %v292
    %v360 = vpop.f32.mrb[0].mxu0
    %v361 = vadd.f32 0.0, %v360
    %v362 = vpop.f32.mrb[0].mxu0
    %363 = vdwg.mxu0
    %v365 = vsel %vm290, %v195, 0
    %367 = vmatprep.subr.mxu0 0.0
    %368 = vmatpush1.msra.mxu0 %v282
    %369 = vmatprep.subr.mxu0 0.0
    %370 = vmatpush1.msra.mxu0 %v283
    %371 = vmatprep.subr.mxu0 0.0
    %372 = vmatpush1.msra.mxu0 %v284
    %373 = vmatprep.subr.mxu0 0.0
    %374 = vmatpush1.msra.mxu0 %v285
    %375 = vmatprep.subr.mxu0 0.0
    %376 = vmatpush1.msra.mxu0 0.0
    %377 = vmatprep.subr.mxu0 0.0
    %378 = vmatpush1.msra.mxu0 0.0
    %379 = vmatprep.subr.mxu0 0.0
    %380 = vmatpush1.msra.mxu0 0.0
    %381 = vmatprep.subr.mxu0 0.0
    %382 = vmatpush1.msra.mxu0 0.0
    %383 = vmatprep.subr.mxu0 0.0
    %384 = vmatpush1.msra.mxu0 0.0
    %385 = vmatprep.subr.mxu0 0.0
    %386 = vmatpush1.msra.mxu0 0.0
    %387 = vmatprep.subr.mxu0 0.0
    %388 = vmatpush1.msra.mxu0 0.0
    %389 = vmatprep.subr.mxu0 0.0
    %390 = vmatpush1.msra.mxu0 0.0
    %391 = vmatprep.subr.mxu0 0.0
    %392 = vmatpush1.msra.mxu0 0.0
    %393 = vmatprep.subr.mxu0 0.0
    %394 = vmatpush1.msra.mxu0 0.0
    %395 = vmatprep.subr.mxu0 0.0
    %396 = vmatpush1.msra.mxu0 0.0
    %397 = vmatprep.subr.mxu0 0.0
    %398 = vmatpush1.msra.mxu0 0.0
    %399 = vmatprep.subr.mxu0 0.0
    %400 = vmatpush1.msra.mxu0 0.0
    %401 = vmatprep.subr.mxu0 0.0
    %402 = vmatpush1.msra.mxu0 0.0
    %403 = vmatprep.subr.mxu0 0.0
    %404 = vmatpush1.msra.mxu0 0.0
    %405 = vmatprep.subr.mxu0 0.0
    %406 = vmatpush1.msra.mxu0 0.0
    %407 = vmatprep.subr.mxu0 0.0
    %408 = vmatpush1.msra.mxu0 0.0
    %409 = vmatprep.subr.mxu0 0.0
    %410 = vmatpush1.msra.mxu0 0.0
    %411 = vmatprep.subr.mxu0 0.0
    %412 = vmatpush1.msra.mxu0 0.0
    %413 = vmatprep.subr.mxu0 0.0
    %414 = vmatpush1.msra.mxu0 0.0
    %415 = vmatprep.subr.mxu0 0.0
    %416 = vmatpush1.msra.mxu0 0.0
    %417 = vmatprep.subr.mxu0 0.0
    %418 = vmatpush1.msra.mxu0 0.0
    %419 = vmatprep.subr.mxu0 0.0
    %420 = vmatpush1.msra.mxu0 0.0
    %421 = vmatprep.subr.mxu0 0.0
    %422 = vmatpush1.msra.mxu0 0.0
    %423 = vmatprep.subr.mxu0 0.0
    %424 = vmatpush1.msra.mxu0 0.0
    %425 = vmatprep.subr.mxu0 0.0
    %426 = vmatpush1.msra.mxu0 0.0
    %427 = vmatprep.subr.mxu0 0.0
    %428 = vmatpush1.msra.mxu0 0.0
    %429 = vmatprep.subr.mxu0 0.0
    %430 = vmatpush1.msra.mxu0 0.0
    %431 = vmatprep.mubr.f32.mxu0 0.0
    %432 = vmatmul.mubr.f32.gmra.mrb[0].mxu0 %v365
    %v433 = vpop.f32.mrb[0].mxu0
    %v434 = vadd.f32 %v361, %v433
    %v435 = vpop.f32.mrb[0].mxu0
    %436 = vdwg.mxu0
    %v437 = vld [vmem:[%s8] sm:$0x1]
    %v439 = vlaneseq
    %v440 = vshrl.u32 %v439, 7
    %v441 = vsub.s32 0, %v440
    %v442 = vrot.slane %v437, %v441
    %v444 = vadd.f32 %v434, %v442
    %445 = vst [vmem:[#allocation13] sm:$0xff] %v444
    // Predicated region
    $region62: #{tpu_custom_call.1} parent=1 // pred_check
      _
    $region63: #{tpu_custom_call.1} parent=1 // pred_check_branch
      %447 = sbr.rel (0) target = $region65
    $region64: #{tpu_custom_call.1} parent=1 // pred_region
      %s449 = ssub.s32 128, 128
      %450 = vsyncadd [#allocation4], %s449
      %s452 = sshll.u32 [#allocation13], 4
      %s453 = int_to_ptr.vmem [resolvable:$true] %s452
      %455 = dma.vmem_to_hbm [thread:$0]  %s453, 128, %s9, [#allocation4]
    $region65: #{tpu_custom_call.1} parent=1 // pred_fallthru
      _
    // Predicated region
    $region66: #{tpu_custom_call.1} parent=1 // pred_check
      _
    $region67: #{tpu_custom_call.1} parent=1 // pred_check_branch
      %457 = sbr.rel (0) target = $region69
    $region68: #{tpu_custom_call.1} parent=1 // pred_region
      %458 = dma.done [#allocation4], 128
    $region69: #{tpu_custom_call.1} parent=1 // pred_fallthru
      _
    %459 = vsyncpa [#allocation3], 1
    %460 = vsyncpa [#allocation6], 1
    %461 = vsyncpa [#allocation9], 1
    %462 = vsyncpa [#allocation12], 1
    %463 = vsyncpa [#allocation4], 1

</llo_original>
